<compile_context>
chip_gen: v7x
topology: tpu7x:2x2x1
jax: 0.10.0
libtpu: 0.0.40
codegen_flags: <defaults>
</compile_context>

<pallas_src>
import functools

import jax
import jax.numpy as jnp
from jax import lax
from jax.experimental import pallas as pl
from jax.experimental.pallas import tpu as pltpu

ALPHA = 0.8
GAMMA = 2.0
LANE = 128
SUBLANE = 8
CHUNK_ROWS = 256                  # (256,128) f32 slab ~= 128 KiB of in-kernel temporaries
TARGET_BYTES_PER_STEP = 4 << 20   # ~4 MiB of DMA per input per grid step


def _round_up(a, b):
    return ((a + b - 1) // b) * b


def _choose_tiling(rows, itemsize):
    """Pick (tile_rows, chunk_rows, n_blocks) for a (rows, 128) layout."""
    max_tile = TARGET_BYTES_PER_STEP // (LANE * itemsize)        # 8192 f32, 16384 bf16
    max_tile = max(CHUNK_ROWS, (max_tile // CHUNK_ROWS) * CHUNK_ROWS)
    if rows >= 2 * max_tile:
        tile_rows = max_tile
    else:
        # Split into (at least) two blocks so v7x megacore feeds both TensorCores.
        tile_rows = _round_up(pl.cdiv(rows, 2), SUBLANE)
    chunk_rows = min(CHUNK_ROWS, tile_rows)
    tile_rows = _round_up(tile_rows, chunk_rows)
    n_blocks = pl.cdiv(rows, tile_rows)
    return tile_rows, chunk_rows, n_blocks


def _focal_bce_partial_kernel(x_ref, t_ref, o_ref, *, tile_rows, chunk_rows,
                              total_rows, hard_targets):
    i = pl.program_id(0)

    def chunk_bce(xs, ts):
        p = xs.astype(jnp.float32)
        t = ts.astype(jnp.float32)
        if hard_targets:
            # t in {0,1}: one log instead of two (halves EUP transcendental pressure).
            pt = jnp.where(t > 0.5, p, 1.0 - p)
            return -jnp.maximum(jnp.log(pt), -100.0)
        # torch.nn.functional.binary_cross_entropy clamps the log terms at -100.
        log_p = jnp.maximum(jnp.log(p), -100.0)
        log_1mp = jnp.maximum(jnp.log(1.0 - p), -100.0)
        # == -(t*log_p + (1-t)*log_1mp), one fewer mul/sub per element on the VALU.
        return -(log_1mp + t * (log_p - log_1mp))

    def partial_sum(bce):
        # (chunk_rows, LANE) -> (SUBLANE, LANE). Two-level sum: several short,
        # independent vadd chains instead of one long serial chain.
        c = chunk_rows // SUBLANE
        k = 1
        for cand in (8, 4, 2):
            if c % cand == 0 and c // cand >= 2:
                k = cand
                break
        if k > 1:
            s = bce.reshape(c // k, k * SUBLANE, LANE).sum(axis=0)
            return s.reshape(k, SUBLANE, LANE).sum(axis=0)
        return bce.reshape(c, SUBLANE, LANE).sum(axis=0)

    def add_chunk(row0, mask_valid=None):
        xs = x_ref[pl.ds(row0, chunk_rows), :]
        ts = t_ref[pl.ds(row0, chunk_rows), :]
        bce = chunk_bce(xs, ts)
        if mask_valid is not None:
            # Select (not multiply) so NaN/garbage rows contribute exactly 0.
            row_ids = lax.broadcasted_iota(jnp.int32, bce.shape, 0)
            bce = jnp.where(row0 + row_ids < mask_valid, bce, 0.0)
        o_ref[...] += partial_sum(bce)

    o_ref[...] = jnp.zeros_like(o_ref)

    if total_rows % tile_rows == 0:
        # Every grid block is full: static trip count, no masking anywhere.
        n_full = tile_rows // chunk_rows

        def body(c, carry):
            add_chunk(pl.multiple_of(c * chunk_rows, chunk_rows))
            return carry

        lax.fori_loop(0, n_full, body, 0)
    else:
        # Only the last grid block is partial; the masked epilogue is gated with
        # pl.when so full blocks never pay for the iota/compare/select.
        valid = jnp.minimum(tile_rows, total_rows - i * tile_rows)
        n_full = valid // chunk_rows

        def body(c, carry):
            add_chunk(pl.multiple_of(c * chunk_rows, chunk_rows))
            return carry

        lax.fori_loop(0, n_full, body, 0)

        @pl.when(n_full * chunk_rows < valid)
        def _():
            add_chunk(pl.multiple_of(n_full * chunk_rows, chunk_rows),
                      mask_valid=valid)


def _bce_sum_jnp(xs, ts):
    """Clamped-BCE elementwise sum in plain jnp (used for tiny tails only)."""
    p = xs.astype(jnp.float32)
    t = ts.astype(jnp.float32)
    log_p = jnp.maximum(jnp.log(p), -100.0)
    log_1mp = jnp.maximum(jnp.log(1.0 - p), -100.0)
    return jnp.sum(-(log_1mp + t * (log_p - log_1mp)), dtype=jnp.float32)


def focal_loss(inputs, targets, *, alpha=ALPHA, gamma=GAMMA, hard_targets=False):
    """Pallas TPU FocalLoss with reduction='mean'. Returns an f32 scalar."""
    assert inputs.shape == targets.shape
    n_elems = inputs.size

    x = inputs.reshape(-1)
    t = targets.reshape(-1)

    rows = n_elems // LANE
    rem = n_elems - rows * LANE

    if rows == 0:
        # Fewer than 128 elements: not worth a kernel launch.
        bce_sum = _bce_sum_jnp(x, t)
    else:
        itemsize = max(jnp.dtype(x.dtype).itemsize, jnp.dtype(t.dtype).itemsize)
        tile_rows, chunk_rows, n_blocks = _choose_tiling(rows, itemsize)

        if rem:
            # Rare (<128-element) unaligned tail: fold it wrapper-side instead of
            # materializing a padded copy of the whole input.
            x_main, t_main = x[: rows * LANE], t[: rows * LANE]
        else:
            x_main, t_main = x, t
        x2 = x_main.reshape(rows, LANE)   # free reshape of a contiguous array
        t2 = t_main.reshape(rows, LANE)

        kernel = functools.partial(
            _focal_bce_partial_kernel,
            tile_rows=tile_rows,
            chunk_rows=chunk_rows,
            total_rows=rows,
            hard_targets=hard_targets,
        )

        partials = pl.pallas_call(
            kernel,
            out_shape=jax.ShapeDtypeStruct((n_blocks * SUBLANE, LANE), jnp.float32),
            grid_spec=pltpu.PrefetchScalarGridSpec(
                num_scalar_prefetch=0,
                grid=(n_blocks,),
                in_specs=[
                    pl.BlockSpec((tile_rows, LANE), lambda i: (i, 0)),
                    pl.BlockSpec((tile_rows, LANE), lambda i: (i, 0)),
                ],
                out_specs=pl.BlockSpec((SUBLANE, LANE), lambda i: (i, 0)),
            ),
            compiler_params=pltpu.CompilerParams(
                dimension_semantics=("parallel",),  # independent blocks -> v7x megacore
                vmem_limit_bytes=40 * 1024 * 1024,  # 16 MiB dbl-buffered inputs + slack
            ),
        )(x2, t2)

        bce_sum = jnp.sum(partials, dtype=jnp.float32)
        if rem:
            bce_sum = bce_sum + _bce_sum_jnp(x[rows * LANE:], t[rows * LANE:])

    # Tiny final reduction + scalar focal transform (one cheap XLA op).
    bce = bce_sum / jnp.float32(n_elems)
    one_m = 1.0 - jnp.exp(-bce)
    pow_term = one_m * one_m if gamma == 2.0 else one_m ** gamma
    return alpha * pow_term * bce


def focal_loss_ref(inputs, targets, *, alpha=ALPHA, gamma=GAMMA):
    p = inputs.astype(jnp.float32)
    t = targets.astype(jnp.float32)
    log_p = jnp.maximum(jnp.log(p), -100.0)
    log_1mp = jnp.maximum(jnp.log(1.0 - p), -100.0)
    bce = jnp.mean(-(t * log_p + (1.0 - t) * log_1mp))
    return alpha * (1.0 - jnp.exp(-bce)) ** gamma * bce


if __name__ == "__main__":
    key = jax.random.PRNGKey(0)
    k1, k2 = jax.random.split(key)
    # (N, C, H, W) probability maps, like a sigmoid segmentation head output.
    shape = (2, 4, 16, 16)
    inputs = jax.nn.sigmoid(jax.random.normal(k1, shape, dtype=jnp.float32))
    targets = (jax.random.uniform(k2, shape) > 0.5).astype(jnp.float32)

    out = focal_loss(inputs, targets)
    out = jax.block_until_ready(out)

    ref = focal_loss_ref(inputs, targets)
    assert jnp.allclose(out, ref, rtol=1e-5, atol=1e-6), (out, ref)
    print("KERNEL_OK")
</pallas_src>

<mosaic_0001>
module attributes {stable_mosaic.version = 11 : i64} {
  func.func @_focal_bce_partial_kernel(%arg0: i32, %arg1: memref<8x128xf32, #tpu.memory_space<vmem>>, %arg2: memref<8x128xf32, #tpu.memory_space<vmem>>, %arg3: memref<8x128xf32, #tpu.memory_space<vmem>>) attributes {dimension_semantics = [#tpu.dimension_semantics<parallel>], iteration_bounds = array<i64: 2>, scalar_prefetch = 0 : i64, scratch_operands = 0 : i64, tpu.core_type = #tpu.core_type<tc>, window_params = [{transform_indices = @transform_0, window_bounds = array<i64: 8, 128>}, {transform_indices = @transform_1, window_bounds = array<i64: 8, 128>}, {transform_indices = @transform_2, window_bounds = array<i64: 8, 128>}]} {
    %cst = arith.constant 0.000000e+00 : f32
    %0 = vector.broadcast %cst : f32 to vector<8x128xf32>
    %c0 = arith.constant 0 : index
    %c0_0 = arith.constant 0 : index
    %1 = vector.load %arg3[%c0, %c0_0] : memref<8x128xf32, #tpu.memory_space<vmem>>, vector<8x128xf32>
    tpu.vector_store %arg3[%c0, %c0_0], %0 {strides = array<i32>} : memref<8x128xf32, #tpu.memory_space<vmem>>, vector<8x128xf32>,
    %c0_i32 = arith.constant 0 : i32
    %c8_i32 = arith.constant 8 : i32
    %2 = arith.muli %c0_i32, %c8_i32 : i32
    %3 = tpu.assume_multiple %2, 8 : i32
    %4 = arith.index_cast %3 : i32 to index
    %c0_1 = arith.constant 0 : index
    %5 = vector.load %arg1[%4, %c0_1] : memref<8x128xf32, #tpu.memory_space<vmem>>, vector<8x128xf32>
    %6 = arith.index_cast %3 : i32 to index
    %c0_2 = arith.constant 0 : index
    %7 = vector.load %arg2[%6, %c0_2] : memref<8x128xf32, #tpu.memory_space<vmem>>, vector<8x128xf32>
    %8 = math.log %5 : vector<8x128xf32>
    %cst_3 = arith.constant -1.000000e+02 : f32
    %9 = vector.broadcast %cst_3 : f32 to vector<8x128xf32>
    %10 = arith.maximumf %8, %9 : vector<8x128xf32>
    %cst_4 = arith.constant 1.000000e+00 : f32
    %11 = vector.broadcast %cst_4 : f32 to vector<8x128xf32>
    %12 = arith.subf %11, %5 : vector<8x128xf32>
    %13 = math.log %12 : vector<8x128xf32>
    %cst_5 = arith.constant -1.000000e+02 : f32
    %14 = vector.broadcast %cst_5 : f32 to vector<8x128xf32>
    %15 = arith.maximumf %13, %14 : vector<8x128xf32>
    %16 = arith.subf %10, %15 : vector<8x128xf32>
    %17 = arith.mulf %7, %16 : vector<8x128xf32>
    %18 = arith.addf %15, %17 : vector<8x128xf32>
    %cst_6 = arith.constant 0.000000e+00 : f32
    %19 = vector.broadcast %cst_6 : f32 to vector<8x128xf32>
    %20 = arith.subf %19, %18 : vector<8x128xf32>
    %c0_7 = arith.constant 0 : index
    %c0_8 = arith.constant 0 : index
    %21 = vector.load %arg3[%c0_7, %c0_8] : memref<8x128xf32, #tpu.memory_space<vmem>>, vector<8x128xf32>
    %22 = vector.shape_cast %20 : vector<8x128xf32> to vector<1x8x128xf32>
    %cst_9 = arith.constant dense<0.000000e+00> : vector<8x128xf32>
    %23 = vector.multi_reduction <add>, %22, %cst_9 [0] : vector<1x8x128xf32> to vector<8x128xf32>
    %24 = arith.addf %21, %23 : vector<8x128xf32>
    %c0_10 = arith.constant 0 : index
    %c0_11 = arith.constant 0 : index
    %25 = vector.load %arg3[%c0_10, %c0_11] : memref<8x128xf32, #tpu.memory_space<vmem>>, vector<8x128xf32>
    tpu.vector_store %arg3[%c0_10, %c0_11], %24 {strides = array<i32>} : memref<8x128xf32, #tpu.memory_space<vmem>>, vector<8x128xf32>,
    %c1_i32 = arith.constant 1 : i32
    return
  }
  func.func @transform_0(%arg0: i32) -> (i32, i32) {
    %c0_i32 = arith.constant 0 : i32
    %c0_i32_0 = arith.constant 0 : i32
    return %arg0, %c0_i32 : i32, i32
  }
  func.func @transform_1(%arg0: i32) -> (i32, i32) {
    %c0_i32 = arith.constant 0 : i32
    %c0_i32_0 = arith.constant 0 : i32
    return %arg0, %c0_i32 : i32, i32
  }
  func.func @transform_2(%arg0: i32) -> (i32, i32) {
    %c0_i32 = arith.constant 0 : i32
    %c0_i32_0 = arith.constant 0 : i32
    return %arg0, %c0_i32 : i32, i32
  }
}

</mosaic_0001>

<llo_original>
// kernel: tpu_custom_call.1
$region0: #{tpu_custom_call.1}
  #allocation0 [shape = 'u32[]', space=smem, size = 0x4, offset = 0x4, fixed_abs, tag = 'smem constant byte address 0x4 - core index']
  #allocation1 [shape = 'u32[144,128]{1,0:T(1,128)}', space=vmem, size = 0x12000, scoped, tag = 'internal scratch']
  %s0 = inlined_call_operand.hbm [shape: f32[16,128], index: 0, kind: input, shape index: {}]
  %s1 = inlined_call_operand.hbm [shape: f32[16,128], index: 1, kind: input, shape index: {}]
  %s2 = inlined_call_operand.hbm [shape: f32[16,128], index: 2, kind: output, shape index: {}]
  %s3 = sld [smem:[#allocation0]]
  $region49: #{tpu_custom_call.1} parent=0
    _
  %s5 = ssub.s32 1, %s3
  %s6 = scalar_select 0, %s5, %s3
  $region1: #{tpu_custom_call.1} parent=0
    #allocation2 [shape = 'u8[8192]{0}', space=vmem, size = 0x2000, scoped, tag = 'input window, operand 0']
    #allocation3 [shape = 's32[2]{0}', space=sflag, size = 0x8, scoped, tag = 'scoped memory for tpu_custom_call.1']
    #allocation4 [shape = 's32[2]{0}', space=sflag, size = 0x8, scoped, tag = 'scoped memory for tpu_custom_call.1']
    #allocation5 [shape = 'u8[8192]{0}', space=vmem, size = 0x2000, scoped, tag = 'input window, operand 1']
    #allocation6 [shape = 's32[2]{0}', space=sflag, size = 0x8, scoped, tag = 'scoped memory for tpu_custom_call.1']
    #allocation7 [shape = 'u8[8192]{0}', space=vmem, size = 0x2000, scoped, tag = 'output window, operand 0']
    %7 = vsyncpa [#allocation3], 0
    %s8 = scalar_lea.sflag [#allocation3], 1
    %9 = vsyncpa %s8, 0
    %10 = vsyncpa [#allocation6], 0
    %s11 = scalar_lea.sflag [#allocation6], 1
    %12 = vsyncpa %s11, 0
    %13 = vsyncpa [#allocation4], 0
    %s14 = scalar_lea.sflag [#allocation4], 1
    %15 = vsyncpa %s14, 0
    loop: start=0, step=1, limit=4
    $region2: #{tpu_custom_call.1} parent=1 // loop_pre_header
      _
    $region3: #{tpu_custom_call.1} parent=1 // loop_header
      %s17 = sphi 0, %s21
      %p18 = scmp.ge.s32.totalorder %s17, 4
      %s27 = sphi 0, %s29
      %s30 = sphi 0, %s27
      %s31 = sphi 0, %s30
      %s47 = sphi 0, %s31
      %s53 = sphi 0, %s55
      %s56 = sphi 0, %s53
      %s57 = sphi 0, %s56
      %s73 = sphi 0, %s57
      %s79 = sphi 0, %s81
      %s82 = sphi 0, %s79
      %s83 = sphi 0, %s82
      %s99 = sphi 0, %s83
    $region4: #{tpu_custom_call.1} parent=1 // loop_header_branch
      %20 = sbr.rel (%p18) target = $region8
    $region5: #{tpu_custom_call.1} parent=1 // loop_body
      %s22 = ssub.s32 %s17, 1
      %s23 = ssub.s32 %s17, 2
      %s24 = sadd.s32 %s17, 1
      %s25 = ssub.s32 %s17, %s24
      %p26 = scmp.eq.s32.totalorder %s25, 0
      %s28 = sadd.s32 %s27, 1
      %s29 = scalar_select %p26, %s27, %s28
      %p32 = pneg %p26
      %p33 = scmp.eq.s32.totalorder %s17, 1
      %p34 = por %p32, %p33
      %p35 = scmp.ne.s32.totalorder %s27, %s30
      %p36 = scmp.eq.s32.totalorder %s17, 0
      %p37 = por %p35, %p36
      %p38 = scmp.ne.s32.totalorder %s27, %s30
      %p39 = scmp.eq.s32.totalorder %s22, 1
      %p40 = por %p38, %p39
      %p41 = scmp.ne.s32.totalorder %s30, %s31
      %p42 = scmp.eq.s32.totalorder %s22, 0
      %p43 = por %p41, %p42
      %p44 = scmp.ne.s32.totalorder %s30, %s31
      %p45 = scmp.eq.s32.totalorder %s23, 1
      %p46 = por %p44, %p45
      %p48 = scmp.ne.s32.totalorder %s31, %s47
      %p49 = scmp.eq.s32.totalorder %s23, 0
      %p50 = por %p48, %p49
      %s51 = ssub.s32 %s17, %s24
      %p52 = scmp.eq.s32.totalorder %s51, 0
      %s54 = sadd.s32 %s53, 1
      %s55 = scalar_select %p52, %s53, %s54
      %p58 = pneg %p52
      %p59 = scmp.eq.s32.totalorder %s17, 1
      %p60 = por %p58, %p59
      %p61 = scmp.ne.s32.totalorder %s53, %s56
      %p62 = scmp.eq.s32.totalorder %s17, 0
      %p63 = por %p61, %p62
      %p64 = scmp.ne.s32.totalorder %s53, %s56
      %p65 = scmp.eq.s32.totalorder %s22, 1
      %p66 = por %p64, %p65
      %p67 = scmp.ne.s32.totalorder %s56, %s57
      %p68 = scmp.eq.s32.totalorder %s22, 0
      %p69 = por %p67, %p68
      %p70 = scmp.ne.s32.totalorder %s56, %s57
      %p71 = scmp.eq.s32.totalorder %s23, 1
      %p72 = por %p70, %p71
      %p74 = scmp.ne.s32.totalorder %s57, %s73
      %p75 = scmp.eq.s32.totalorder %s23, 0
      %p76 = por %p74, %p75
      %s77 = ssub.s32 %s17, %s24
      %p78 = scmp.eq.s32.totalorder %s77, 0
      %s80 = sadd.s32 %s79, 1
      %s81 = scalar_select %p78, %s79, %s80
      %p84 = pneg %p78
      %p85 = scmp.eq.s32.totalorder %s17, 1
      %p86 = por %p84, %p85
      %p87 = scmp.ne.s32.totalorder %s79, %s82
      %p88 = scmp.eq.s32.totalorder %s17, 0
      %p89 = por %p87, %p88
      %p90 = scmp.ne.s32.totalorder %s79, %s82
      %p91 = scmp.eq.s32.totalorder %s22, 1
      %p92 = por %p90, %p91
      %p93 = scmp.ne.s32.totalorder %s82, %s83
      %p94 = scmp.eq.s32.totalorder %s22, 0
      %p95 = por %p93, %p94
      %p96 = scmp.ne.s32.totalorder %s82, %s83
      %p97 = scmp.eq.s32.totalorder %s23, 1
      %p98 = por %p96, %p97
      %p100 = scmp.ne.s32.totalorder %s83, %s99
      %p101 = scmp.eq.s32.totalorder %s23, 0
      %p102 = por %p100, %p101
      %p103 = scmp.le.s32.totalorder 1, %s17
      %p104 = scmp.lt.s32.totalorder %s17, 3
      %p105 = pnand %p103, %p104
      %p106 = pneg %p105
      // Predicated region
      $region9: #{tpu_custom_call.1} parent=5 // pred_check
        _
      $region10: #{tpu_custom_call.1} parent=5 // pred_check_branch
        %108 = sbr.rel (%p105) target = $region12
      $region11: #{tpu_custom_call.1} parent=5 // pred_region
        %s109 = ssub.s32 %s17, 1
      $region12: #{tpu_custom_call.1} parent=5 // pred_fallthru
        _
      %p110 = scmp.lt.s32.totalorder %s17, 2
      // Predicated region
      $region13: #{tpu_custom_call.1} parent=5 // pred_check
        %p111 = pneg %p110
      $region14: #{tpu_custom_call.1} parent=5 // pred_check_branch
        %113 = sbr.rel (%p111) target = $region16
      $region15: #{tpu_custom_call.1} parent=5 // pred_region
        // Predicated region
        $region17: #{tpu_custom_call.1} parent=15 // pred_check
          %p114 = pneg %p37
        $region18: #{tpu_custom_call.1} parent=15 // pred_check_branch
          %116 = sbr.rel (%p114) target = $region20
        $region19: #{tpu_custom_call.1} parent=15 // pred_region
          %s117 = sand.u32 %s27, 1
          %s118 = scalar_lea.sflag [#allocation3], %s117
          %s119 = sand.u32 %s27, 1
          %s120 = smul.addr %s119, 8
          %s121 = scalar_lea.vmem [#allocation2], %s120
          %s123 = ssub.s32 128, 128
          %124 = vsyncadd %s118, %s123
          %s125 = smul.addr %s17, 128
          %s126 = scalar_lea.hbm %s0, %s125
          %s128 = sshll.u32 %s121, 4
          %s129 = int_to_ptr.vmem [resolvable:$true] %s128
          %131 = dma.hbm_to_vmem [thread:$0]  %s126, 128, %s129, %s118
        $region20: #{tpu_custom_call.1} parent=15 // pred_fallthru
          _
        // Predicated region
        $region21: #{tpu_custom_call.1} parent=15 // pred_check
          %p132 = pneg %p63
        $region22: #{tpu_custom_call.1} parent=15 // pred_check_branch
          %134 = sbr.rel (%p132) target = $region24
        $region23: #{tpu_custom_call.1} parent=15 // pred_region
          %s135 = sand.u32 %s53, 1
          %s136 = scalar_lea.sflag [#allocation6], %s135
          %s137 = sand.u32 %s53, 1
          %s138 = smul.addr %s137, 8
          %s139 = scalar_lea.vmem [#allocation5], %s138
          %s141 = ssub.s32 128, 128
          %142 = vsyncadd %s136, %s141
          %s143 = smul.addr %s17, 128
          %s144 = scalar_lea.hbm %s1, %s143
          %s146 = sshll.u32 %s139, 4
          %s147 = int_to_ptr.vmem [resolvable:$true] %s146
          %149 = dma.hbm_to_vmem [thread:$0]  %s144, 128, %s147, %s136
        $region24: #{tpu_custom_call.1} parent=15 // pred_fallthru
          _
      $region16: #{tpu_custom_call.1} parent=5 // pred_fallthru
        _
      %p150 = scmp.le.s32.totalorder 1, %s17
      %p151 = scmp.lt.s32.totalorder %s17, 3
      %p152 = pnand %p150, %p151
      %p153 = pneg %p152
      // Predicated region
      $region25: #{tpu_custom_call.1} parent=5 // pred_check
        _
      $region26: #{tpu_custom_call.1} parent=5 // pred_check_branch
        %155 = sbr.rel (%p152) target = $region28
      $region27: #{tpu_custom_call.1} parent=5 // pred_region
        %s156 = ssub.s32 %s17, 1
        %s157 = sand.u32 %s30, 1
        %s158 = scalar_lea.sflag [#allocation3], %s157
        %s159 = sand.u32 %s30, 1
        %s160 = smul.addr %s159, 8
        %s161 = scalar_lea.vmem [#allocation2], %s160
        // Predicated region
        $region29: #{tpu_custom_call.1} parent=27 // pred_check
          %p162 = pneg %p43
        $region30: #{tpu_custom_call.1} parent=27 // pred_check_branch
          %164 = sbr.rel (%p162) target = $region32
        $region31: #{tpu_custom_call.1} parent=27 // pred_region
          %165 = dma.done %s158, 128
        $region32: #{tpu_custom_call.1} parent=27 // pred_fallthru
          _
        %s166 = sand.u32 %s56, 1
        %s167 = scalar_lea.sflag [#allocation6], %s166
        %s168 = sand.u32 %s56, 1
        %s169 = smul.addr %s168, 8
        %s170 = scalar_lea.vmem [#allocation5], %s169
        // Predicated region
        $region33: #{tpu_custom_call.1} parent=27 // pred_check
          %p171 = pneg %p69
        $region34: #{tpu_custom_call.1} parent=27 // pred_check_branch
          %173 = sbr.rel (%p171) target = $region36
        $region35: #{tpu_custom_call.1} parent=27 // pred_region
          %174 = dma.done %s167, 128
        $region36: #{tpu_custom_call.1} parent=27 // pred_fallthru
          _
        %s175 = sand.u32 %s30, 1
        %s176 = scalar_lea.sflag [#allocation3], %s175
        %s177 = sand.u32 %s30, 1
        %s178 = smul.addr %s177, 8
        %s179 = scalar_lea.vmem [#allocation2], %s178
        %p180 = pneg %p43
        %p181 = pneg %p40
        %s182 = sand.u32 %s56, 1
        %s183 = scalar_lea.sflag [#allocation6], %s182
        %s184 = sand.u32 %s56, 1
        %s185 = smul.addr %s184, 8
        %s186 = scalar_lea.vmem [#allocation5], %s185
        %p187 = pneg %p69
        %p188 = pneg %p66
        %p189 = pneg %p95
        %p190 = pneg %p92
        %s191 = sand.u32 %s82, 1
        %s192 = scalar_lea.sflag [#allocation4], %s191
        %s193 = sand.u32 %s82, 1
        %s194 = smul.addr %s193, 8
        %s195 = scalar_lea.vmem [#allocation7], %s194
        %196 = vst [vmem:[%s195] sm:$0xff] 0.0
        %v197 = vld [vmem:[%s161] sm:$0xff]
        %v198 = vld [vmem:[%s170] sm:$0xff]
        %v199 = vlog2.pop %v197
        %v200 = vmul.f32 %v199, 0.6931472
        %v201 = vmax.f32 %v200, -100.0
        %v202 = vsub.f32 1.0, %v197
        %v203 = vlog2.pop %v202
        %v204 = vmul.f32 %v203, 0.6931472
        %v205 = vmax.f32 %v204, -100.0
        %v206 = vsub.f32 %v201, %v205
        %v207 = vmul.f32 %v198, %v206
        %v208 = vadd.f32 %v205, %v207
        %v209 = vsub.f32 0.0, %v208
        %v210 = vld [vmem:[%s195] sm:$0xff]
        %v211 = vadd.f32 %v209, 0.0
        %v212 = vadd.f32 %v210, %v211
        %213 = vst [vmem:[%s195] sm:$0xff] %v212
        %s214 = sand.u32 %s82, 1
        %s215 = scalar_lea.sflag [#allocation4], %s214
        %s216 = sand.u32 %s82, 1
        %s217 = smul.addr %s216, 8
        %s218 = scalar_lea.vmem [#allocation7], %s217
        // Predicated region
        $region37: #{tpu_custom_call.1} parent=27 // pred_check
          %p219 = pneg %p92
        $region38: #{tpu_custom_call.1} parent=27 // pred_check_branch
          %221 = sbr.rel (%p219) target = $region40
        $region39: #{tpu_custom_call.1} parent=27 // pred_region
          %s223 = ssub.s32 128, 128
          %224 = vsyncadd %s215, %s223
          %s225 = smul.addr %s22, 128
          %s226 = scalar_lea.hbm %s2, %s225
          %s228 = sshll.u32 %s218, 4
          %s229 = int_to_ptr.vmem [resolvable:$true] %s228
          %231 = dma.vmem_to_hbm [thread:$0]  %s229, 128, %s226, %s215
        $region40: #{tpu_custom_call.1} parent=27 // pred_fallthru
          _
      $region28: #{tpu_custom_call.1} parent=5 // pred_fallthru
        _
      %p232 = scmp.le.s32.totalorder 2, %s17
      // Predicated region
      $region41: #{tpu_custom_call.1} parent=5 // pred_check
        %p233 = pneg %p232
      $region42: #{tpu_custom_call.1} parent=5 // pred_check_branch
        %235 = sbr.rel (%p233) target = $region44
      $region43: #{tpu_custom_call.1} parent=5 // pred_region
        %s236 = ssub.s32 %s17, 2
        // Predicated region
        $region45: #{tpu_custom_call.1} parent=43 // pred_check
          %p237 = pneg %p98
        $region46: #{tpu_custom_call.1} parent=43 // pred_check_branch
          %239 = sbr.rel (%p237) target = $region48
        $region47: #{tpu_custom_call.1} parent=43 // pred_region
          %s240 = sand.u32 %s83, 1
          %s241 = scalar_lea.sflag [#allocation4], %s240
          %s242 = sand.u32 %s83, 1
          %s243 = smul.addr %s242, 8
          %s244 = scalar_lea.vmem [#allocation7], %s243
          %245 = dma.done %s241, 128
        $region48: #{tpu_custom_call.1} parent=43 // pred_fallthru
          _
      $region44: #{tpu_custom_call.1} parent=5 // pred_fallthru
        _
    $region6: #{tpu_custom_call.1} parent=1 // loop_footer
      %s21 = sadd.s32 1, %s17
    $region7: #{tpu_custom_call.1} parent=1 // loop_footer_branch
      %16 = sbr.rel target = $region3
    $region8: #{tpu_custom_call.1} parent=1 // loop_exit
      _
    %246 = vsyncpa [#allocation3], 1
    %s247 = scalar_lea.sflag [#allocation3], 1
    %248 = vsyncpa %s247, 1
    %249 = vsyncpa [#allocation6], 1
    %s250 = scalar_lea.sflag [#allocation6], 1
    %251 = vsyncpa %s250, 1
    %252 = vsyncpa [#allocation4], 1
    %s253 = scalar_lea.sflag [#allocation4], 1
    %254 = vsyncpa %s253, 1

</llo_original>
